<compile_context>
chip_gen: v7x
topology: tpu7x:2x2x1
jax: 0.10.0
libtpu: 0.0.40
codegen_flags: <defaults>
</compile_context>

<pallas_src>
import jax
import jax.numpy as jnp
import numpy as np
from jax.experimental import pallas as pl
from jax.experimental.pallas import tpu as pltpu


def _sublane_multiple(dtype):
    """Rows-per-sublane-tile requirement for a dtype (8 for 32-bit, 16 for 16-bit...)."""
    return max(8, 32 // np.dtype(dtype).itemsize)


def _choose_rows_per_tile(batch, length, row_align, row_cap):
    """Pick TL (rows of the flattened (B*L, H) array per grid step).

    Valid TL either divides `length` (tile stays inside one batch) or is a
    multiple of `length` (tile spans whole batches).  Prefers the largest TL
    within the cap that still leaves >= 2 grid steps (v7x has 2 TensorCores).
    Returns None if no aligned candidate exists (caller pads the sequence).
    """
    total = batch * length
    cap = min(row_cap, total)
    cands = set()
    q = 1
    while q * length <= cap:            # tiles spanning q whole batches
        tl = q * length
        if tl % row_align == 0 and batch % q == 0:
            cands.add(tl)
        q += 1
    tl = row_align
    while tl <= min(length, cap):       # tiles subdividing one batch
        if length % tl == 0:
            cands.add(tl)
        tl += row_align
    if not cands:
        return None
    multi = [t for t in cands if total // t >= 2]
    return max(multi) if multi else max(cands)


def _upsample_kernel(x_ref, halo_ref, keep_ref, w_ref, b_ref, out_ref):
    # x_ref    : (TL, H)     current row tile of the flattened (B*L, H) input
    # halo_ref : (1, H)      first row of the NEXT tile (masked out by `keep`
    #                        when it belongs to a different batch / is past end)
    # keep_ref : (TL, 1)     1.0 where x[m+1] exists in the same batch, else 0.0
    # w_ref    : (H, 3H)     packed taps [W[:,:,1] | W[:,:,2] | W[:,:,0]]
    # b_ref    : (1, H)      bias (f32)
    # out_ref  : (TL, 2H)    row m = [out[2m] | out[2m+1]]  (lane-packed)
    h = x_ref.shape[-1]

    # Single fat MXU pass over all three taps: [x@W1 | x@W2 | x@W0].
    r = jnp.dot(x_ref[...], w_ref[...], preferred_element_type=jnp.float32)
    # 1-row fixup for the tile's last position: x[start+TL] @ W0.
    halo_term = jnp.dot(halo_ref[...], w_ref[:, 2 * h:],
                        preferred_element_type=jnp.float32)          # (1, h)
    # shifted[i] = (x @ W0)[i+1]; last row comes from the halo matmul.
    shifted = jnp.concatenate([r[1:, 2 * h:], halo_term], axis=0)     # (TL, h)

    bias = b_ref[...]                                                 # (1, h)
    y_even = r[:, :h] + bias
    y_odd = r[:, h:2 * h] + shifted * keep_ref[...] + bias

    if h % 128 == 0:
        # Lane-aligned halves: two direct unmasked stores, no concat copy.
        out_ref[:, :h] = y_even.astype(out_ref.dtype)
        out_ref[:, h:] = y_odd.astype(out_ref.dtype)
    else:
        out_ref[...] = jnp.concatenate([y_even, y_odd], axis=1).astype(out_ref.dtype)


def upsample_forward(x, weight, bias, *, operand_dtype=None, out_dtype=None,
                     vmem_budget_bytes=4 << 20, max_tile_rows=1024):
    """x: (B, L, H); weight: (H, H, 3) (PyTorch ConvTranspose1d (C_in,C_out,K));
    bias: (H,).  Returns (B, 2L, H).

    operand_dtype: optional cast of matmul operands (e.g. jnp.bfloat16) to cut
    HBM read traffic; accumulation stays f32.
    out_dtype: optional narrower output dtype (e.g. jnp.bfloat16) to cut the
    dominant write traffic.  Defaults keep the input dtype exactly.
    """
    B, L, H = x.shape
    if out_dtype is None:
        out_dtype = x.dtype
    if operand_dtype is not None:
        x = x.astype(operand_dtype)
        weight = weight.astype(operand_dtype)
    op_dtype = x.dtype

    in_b = np.dtype(op_dtype).itemsize
    out_b = np.dtype(out_dtype).itemsize
    row_align = max(_sublane_multiple(op_dtype), _sublane_multiple(out_dtype))
    row_cap = max(row_align,
                  min(max_tile_rows, vmem_budget_bytes // (H * (in_b + 2 * out_b))))

    TL = _choose_rows_per_tile(B, L, row_align, row_cap)
    L_run = L
    if TL is None:
        # Pathological L (no aligned divisor/multiple): pad the sequence with
        # zero rows; zeros keep the transposed-conv math exact for the first
        # 2*L outputs, which we slice out at the end.
        L_run = ((L + row_align - 1) // row_align) * row_align
        x = jnp.pad(x, ((0, 0), (0, L_run - L), (0, 0)))
        TL = _choose_rows_per_tile(B, L_run, row_align, row_cap)
        assert TL is not None

    R = B * L_run
    nt = R // TL
    xf = x.reshape(R, H)

    # Halo: first row of the next tile (content only used when `keep` says the
    # next row belongs to the same batch; zeros past the end of the data).
    nxt = xf[TL::TL, :]                                               # (nt-1, H)
    halo = jnp.concatenate([nxt, jnp.zeros((1, H), xf.dtype)],
                           axis=0).reshape(nt, 1, H)

    # keep[m] = 1.0 iff x[m+1] exists within the same batch (static pattern).
    keep = jnp.asarray(((np.arange(R) + 1) % L_run != 0).astype(np.float32)
                       ).reshape(R, 1)

    # Pack taps: [even tap W1 | odd-x tap W2 | odd-shift tap W0]  -> (H, 3H).
    w_packed = jnp.concatenate(
        [weight[:, :, 1], weight[:, :, 2], weight[:, :, 0]], axis=1)
    bias2d = bias.astype(jnp.float32).reshape(1, H)

    flops = 6 * R * H * H + 2 * nt * H * H
    bytes_accessed = int(R * H * in_b + nt * H * in_b + R * 4
                         + 3 * H * H * in_b + H * 4 + R * 2 * H * out_b)

    # VMEM: x/halo/keep/out double-buffered, weight/bias single-buffered.
    need = (2 * (TL * H * in_b + H * in_b + TL * 4 + TL * 2 * H * out_b)
            + 3 * H * H * in_b + H * 4)
    # TODO(synk): for very large H (>= 2048 f32) the resident packed weight should
    # be cast to bf16 or tiled over its 3H output columns to fit v7x's 64 MiB VMEM.
    vmem_limit = int(min(max(2 * need, 16 << 20), 60 << 20))

    out = pl.pallas_call(
        _upsample_kernel,
        out_shape=jax.ShapeDtypeStruct((R, 2 * H), out_dtype),
        grid_spec=pltpu.PrefetchScalarGridSpec(
            num_scalar_prefetch=0,
            grid=(nt,),
            in_specs=[
                pl.BlockSpec((TL, H), lambda t: (t, 0)),             # x row tile
                pl.BlockSpec((None, 1, H), lambda t: (t, 0, 0)),     # halo row
                pl.BlockSpec((TL, 1), lambda t: (t, 0)),             # keep mask
                pl.BlockSpec((H, 3 * H), lambda t: (0, 0),
                             pipeline_mode=pl.Buffered(1)),          # packed taps (single-buffered)
                pl.BlockSpec((1, H), lambda t: (0, 0),
                             pipeline_mode=pl.Buffered(1)),          # bias (single-buffered)
            ],
            out_specs=pl.BlockSpec((TL, 2 * H), lambda t: (t, 0)),
        ),
        compiler_params=pltpu.CompilerParams(
            dimension_semantics=("parallel",),
            vmem_limit_bytes=vmem_limit),
        cost_estimate=pl.CostEstimate(
            flops=flops, transcendentals=0, bytes_accessed=bytes_accessed),
    )(xf, halo, keep, w_packed, bias2d)

    # (R, 2H) -> (B, 2*L_run, H) is a pure row-major reinterpretation that
    # interleaves even/odd positions for free (no transpose, no HBM pass).
    out = out.reshape(B, 2 * L_run, H)
    if L_run != L:
        out = out[:, :2 * L, :]
    return out


def reference_conv_transpose1d(x, weight, bias, stride=2, padding=1,
                               output_padding=1):
    """Naive scatter-definition of ConvTranspose1d on (B, L, H) input,
    returning (B, L_out, H). Used only to validate the kernel."""
    x = np.asarray(x, dtype=np.float64)
    weight = np.asarray(weight, dtype=np.float64)
    bias = np.asarray(bias, dtype=np.float64)
    B, L, H = x.shape
    K = weight.shape[2]
    L_out = (L - 1) * stride - 2 * padding + K + output_padding
    out = np.tile(bias[None, None, :], (B, L_out, 1))
    for s in range(L):
        for k in range(K):
            t = s * stride - padding + k
            if 0 <= t < L_out:
                out[:, t, :] += x[:, s, :] @ weight[:, :, k]
    return out


def _make_case(key, B, L, H):
    kx, kw, kb = jax.random.split(key, 3)
    fan = H * 3
    x = jax.random.normal(kx, (B, L, H), dtype=jnp.float32)
    # Deterministic synthetic parameters; PyTorch weight shape (C_in, C_out, K).
    w = jax.random.uniform(kw, (H, H, 3), dtype=jnp.float32,
                           minval=-1.0 / np.sqrt(fan), maxval=1.0 / np.sqrt(fan))
    b = jax.random.uniform(kb, (H,), dtype=jnp.float32,
                           minval=-1.0 / np.sqrt(fan), maxval=1.0 / np.sqrt(fan))
    return x, w, b


if __name__ == "__main__":
    key = jax.random.PRNGKey(0)

    cases = [
        (2, 8, 32),    # spec-sized: batch=2, seq=8, hidden=32 (one batch per tile)
        (1, 32, 48),   # TL < L: exercises the cross-tile halo row
        (8, 8, 32),    # tile spans 4 batches: exercises batch-boundary masking
        (2, 16, 128),  # lane-aligned hidden: exercises direct half-width stores
    ]
    for (B, L, H) in cases:
        key, sub = jax.random.split(key)
        x, w, b = _make_case(sub, B, L, H)
        y = jax.block_until_ready(upsample_forward(x, w, b))
        assert y.shape == (B, 2 * L, H), y.shape
        y_ref = reference_conv_transpose1d(x, w, b)
        np.testing.assert_allclose(np.asarray(y), y_ref, rtol=1e-5, atol=1e-5)

    # Low-precision path (bf16 operands + bf16 output) with loose tolerance.
    key, sub = jax.random.split(key)
    x, w, b = _make_case(sub, 2, 8, 32)
    y16 = jax.block_until_ready(
        upsample_forward(x, w, b, operand_dtype=jnp.bfloat16,
                         out_dtype=jnp.bfloat16))
    assert y16.shape == (2, 16, 32), y16.shape
    y_ref = reference_conv_transpose1d(x, w, b)
    np.testing.assert_allclose(np.asarray(y16).astype(np.float32), y_ref,
                               rtol=5e-2, atol=5e-2)

    print("KERNEL_OK")
</pallas_src>

<mosaic_0001>
module attributes {stable_mosaic.version = 11 : i64} {
  func.func @_upsample_kernel(%arg0: i32, %arg1: memref<8x32xf32, #tpu.memory_space<vmem>>, %arg2: memref<1x1x32xf32, #tpu.memory_space<vmem>>, %arg3: memref<8x1xf32, #tpu.memory_space<vmem>>, %arg4: memref<32x96xf32, #tpu.memory_space<vmem>>, %arg5: memref<1x32xf32, #tpu.memory_space<vmem>>, %arg6: memref<8x64xf32, #tpu.memory_space<vmem>>) attributes {dimension_semantics = [#tpu.dimension_semantics<parallel>], iteration_bounds = array<i64: 2>, scalar_prefetch = 0 : i64, scratch_operands = 0 : i64, tpu.core_type = #tpu.core_type<tc>, window_params = [{transform_indices = @transform_0, window_bounds = array<i64: 8, 32>}, {transform_indices = @transform_1, window_bounds = array<i64: 1, 1, 32>}, {transform_indices = @transform_2, window_bounds = array<i64: 8, 1>}, {pipeline_mode = #tpu.pipeline_mode<synchronous>, transform_indices = @transform_3, window_bounds = array<i64: 32, 96>}, {pipeline_mode = #tpu.pipeline_mode<synchronous>, transform_indices = @transform_4, window_bounds = array<i64: 1, 32>}, {transform_indices = @transform_5, window_bounds = array<i64: 8, 64>}]} {
    %c0 = arith.constant 0 : index
    %c0_0 = arith.constant 0 : index
    %0 = vector.load %arg1[%c0, %c0_0] : memref<8x32xf32, #tpu.memory_space<vmem>>, vector<8x32xf32>
    %c0_1 = arith.constant 0 : index
    %c0_2 = arith.constant 0 : index
    %1 = vector.load %arg4[%c0_1, %c0_2] : memref<32x96xf32, #tpu.memory_space<vmem>>, vector<32x96xf32>
    %cst = arith.constant dense<0.000000e+00> : vector<8x96xf32>
    %2 = tpu.matmul %0, %1, %cst {dimension_numbers = #tpu.dot_dimension_numbers<[1], [0], [0], [1], [0, 0, 1, 1], [], []>} : vector<8x32xf32>, vector<32x96xf32>, vector<8x96xf32> -> vector<8x96xf32>
    %c0_3 = arith.constant 0 : index
    %c0_4 = arith.constant 0 : index
    %c0_5 = arith.constant 0 : index
    %3 = vector.load %arg2[%c0_3, %c0_4, %c0_5] : memref<1x1x32xf32, #tpu.memory_space<vmem>>, vector<1x1x32xf32>
    %4 = vector.shape_cast %3 : vector<1x1x32xf32> to vector<1x32xf32>
    %c0_6 = arith.constant 0 : index
    %c64 = arith.constant 64 : index
    %5 = vector.load %arg4[%c0_6, %c64] : memref<32x96xf32, #tpu.memory_space<vmem>>, vector<32x32xf32>
    %cst_7 = arith.constant dense<0.000000e+00> : vector<1x32xf32>
    %6 = tpu.matmul %4, %5, %cst_7 {dimension_numbers = #tpu.dot_dimension_numbers<[1], [0], [0], [1], [0, 0, 1, 1], [], []>} : vector<1x32xf32>, vector<32x32xf32>, vector<1x32xf32> -> vector<1x32xf32>
    %7 = vector.extract_strided_slice %2 {offsets = [1, 64], sizes = [7, 32], strides = [1, 1]} : vector<8x96xf32> to vector<7x32xf32>
    %8 = tpu.concatenate %7, %6 in 0 : vector<7x32xf32>, vector<1x32xf32> -> vector<8x32xf32>
    %c0_8 = arith.constant 0 : index
    %c0_9 = arith.constant 0 : index
    %9 = vector.load %arg5[%c0_8, %c0_9] : memref<1x32xf32, #tpu.memory_space<vmem>>, vector<1x32xf32>
    %10 = vector.extract_strided_slice %2 {offsets = [0, 0], sizes = [8, 32], strides = [1, 1]} : vector<8x96xf32> to vector<8x32xf32>
    %11 = vector.broadcast %9 : vector<1x32xf32> to vector<8x32xf32>
    %12 = arith.addf %10, %11 : vector<8x32xf32>
    %13 = vector.extract_strided_slice %2 {offsets = [0, 32], sizes = [8, 32], strides = [1, 1]} : vector<8x96xf32> to vector<8x32xf32>
    %c0_10 = arith.constant 0 : index
    %c0_11 = arith.constant 0 : index
    %14 = vector.load %arg3[%c0_10, %c0_11] : memref<8x1xf32, #tpu.memory_space<vmem>>, vector<8x1xf32>
    %15 = vector.broadcast %14 : vector<8x1xf32> to vector<8x32xf32>
    %16 = arith.mulf %8, %15 : vector<8x32xf32>
    %17 = arith.addf %13, %16 : vector<8x32xf32>
    %18 = vector.broadcast %9 : vector<1x32xf32> to vector<8x32xf32>
    %19 = arith.addf %17, %18 : vector<8x32xf32>
    %20 = tpu.concatenate %12, %19 in 1 : vector<8x32xf32>, vector<8x32xf32> -> vector<8x64xf32>
    %c0_12 = arith.constant 0 : index
    %c0_13 = arith.constant 0 : index
    %21 = vector.load %arg6[%c0_12, %c0_13] : memref<8x64xf32, #tpu.memory_space<vmem>>, vector<8x64xf32>
    tpu.vector_store %arg6[%c0_12, %c0_13], %20 {strides = array<i32>} : memref<8x64xf32, #tpu.memory_space<vmem>>, vector<8x64xf32>,
    return
  }
  func.func @transform_0(%arg0: i32) -> (i32, i32) {
    %c0_i32 = arith.constant 0 : i32
    %c0_i32_0 = arith.constant 0 : i32
    return %arg0, %c0_i32 : i32, i32
  }
  func.func @transform_1(%arg0: i32) -> (i32, i32, i32) {
    %c0_i32 = arith.constant 0 : i32
    %c0_i32_0 = arith.constant 0 : i32
    %c0_i32_1 = arith.constant 0 : i32
    return %arg0, %c0_i32, %c0_i32_0 : i32, i32, i32
  }
  func.func @transform_2(%arg0: i32) -> (i32, i32) {
    %c0_i32 = arith.constant 0 : i32
    %c0_i32_0 = arith.constant 0 : i32
    return %arg0, %c0_i32 : i32, i32
  }
  func.func @transform_3(%arg0: i32) -> (i32, i32) {
    %c0_i32 = arith.constant 0 : i32
    %c0_i32_0 = arith.constant 0 : i32
    %c0_i32_1 = arith.constant 0 : i32
    return %c0_i32, %c0_i32_0 : i32, i32
  }
  func.func @transform_4(%arg0: i32) -> (i32, i32) {
    %c0_i32 = arith.constant 0 : i32
    %c0_i32_0 = arith.constant 0 : i32
    %c0_i32_1 = arith.constant 0 : i32
    return %c0_i32, %c0_i32_0 : i32, i32
  }
  func.func @transform_5(%arg0: i32) -> (i32, i32) {
    %c0_i32 = arith.constant 0 : i32
    %c0_i32_0 = arith.constant 0 : i32
    return %arg0, %c0_i32 : i32, i32
  }
}

</mosaic_0001>

<llo_original>
// kernel: tpu_custom_call.1
$region0: #{tpu_custom_call.1}
  #allocation0 [shape = 'u32[]', space=smem, size = 0x4, offset = 0x4, fixed_abs, tag = 'smem constant byte address 0x4 - core index']
  #allocation1 [shape = 'u32[144,128]{1,0:T(1,128)}', space=vmem, size = 0x12000, scoped, tag = 'internal scratch']
  %s0 = inlined_call_operand.vmem [shape: f32[16,32], index: 0, kind: input, shape index: {}]
  %s1 = inlined_call_operand.vmem [shape: f32[2,1,32], index: 1, kind: input, shape index: {}]
  %s2 = inlined_call_operand.vmem [shape: f32[16,1], index: 2, kind: input, shape index: {}]
  %s3 = inlined_call_operand.hbm [shape: f32[32,96], index: 3, kind: input, shape index: {}]
  %s4 = inlined_call_operand.vmem [shape: f32[1,32], index: 4, kind: input, shape index: {}]
  %s5 = inlined_call_operand.hbm [shape: f32[16,64], index: 5, kind: output, shape index: {}]
  %s6 = sld [smem:[#allocation0]]
  $region57: #{tpu_custom_call.1} parent=0
    _
  %s8 = ssub.s32 1, %s6
  %s9 = scalar_select 0, %s8, %s6
  $region1: #{tpu_custom_call.1} parent=0
    #allocation2 [shape = 'u8[16384]{0}', space=vmem, size = 0x4000, scoped, tag = 'input window, operand 3, single buffered']
    #allocation3 [shape = 's32[2]{0}', space=sflag, size = 0x8, scoped, tag = 'scoped memory for tpu_custom_call.1']
    #allocation4 [shape = 's32[2]{0}', space=sflag, size = 0x8, scoped, tag = 'scoped memory for tpu_custom_call.1']
    #allocation5 [shape = 'u8[8192]{0}', space=vmem, size = 0x2000, scoped, tag = 'output window, operand 0']
    %10 = vsyncpa [#allocation3], 0
    %11 = vsyncpa [#allocation4], 0
    %s12 = scalar_lea.sflag [#allocation4], 1
    %13 = vsyncpa %s12, 0
    loop: start=0, step=1, limit=4
    $region2: #{tpu_custom_call.1} parent=1 // loop_pre_header
      _
    $region3: #{tpu_custom_call.1} parent=1 // loop_header
      %s15 = sphi 0, %s19
      %p16 = scmp.ge.s32.totalorder %s15, 4
      %s25 = sphi 0, %s27
      %s28 = sphi 0, %s25
      %s29 = sphi 0, %s28
      %s45 = sphi 0, %s29
      %s51 = sphi 0, %s53
      %s54 = sphi 0, %s51
      %s55 = sphi 0, %s54
      %s71 = sphi 0, %s55
      %s77 = sphi 0, %s79
      %s80 = sphi 0, %s77
      %s81 = sphi 0, %s80
      %s97 = sphi 0, %s81
      %s101 = sphi 0, %s101
      %s103 = sphi 0, %s101
      %s104 = sphi 0, %s103
      %s118 = sphi 0, %s104
      %s122 = sphi 0, %s122
      %s124 = sphi 0, %s122
      %s125 = sphi 0, %s124
      %s139 = sphi 0, %s125
      %s145 = sphi 0, %s147
      %s148 = sphi 0, %s145
      %s149 = sphi 0, %s148
      %s165 = sphi 0, %s149
    $region4: #{tpu_custom_call.1} parent=1 // loop_header_branch
      %18 = sbr.rel (%p16) target = $region8
    $region5: #{tpu_custom_call.1} parent=1 // loop_body
      %s20 = ssub.s32 %s15, 1
      %s21 = ssub.s32 %s15, 2
      %s22 = sadd.s32 %s15, 1
      %s23 = ssub.s32 %s15, %s22
      %p24 = scmp.eq.s32.totalorder %s23, 0
      %s26 = sadd.s32 %s25, 1
      %s27 = scalar_select %p24, %s25, %s26
      %p30 = pneg %p24
      %p31 = scmp.eq.s32.totalorder %s15, 1
      %p32 = por %p30, %p31
      %p33 = scmp.ne.s32.totalorder %s25, %s28
      %p34 = scmp.eq.s32.totalorder %s15, 0
      %p35 = por %p33, %p34
      %p36 = scmp.ne.s32.totalorder %s25, %s28
      %p37 = scmp.eq.s32.totalorder %s20, 1
      %p38 = por %p36, %p37
      %p39 = scmp.ne.s32.totalorder %s28, %s29
      %p40 = scmp.eq.s32.totalorder %s20, 0
      %p41 = por %p39, %p40
      %p42 = scmp.ne.s32.totalorder %s28, %s29
      %p43 = scmp.eq.s32.totalorder %s21, 1
      %p44 = por %p42, %p43
      %p46 = scmp.ne.s32.totalorder %s29, %s45
      %p47 = scmp.eq.s32.totalorder %s21, 0
      %p48 = por %p46, %p47
      %s49 = ssub.s32 %s15, %s22
      %p50 = scmp.eq.s32.totalorder %s49, 0
      %s52 = sadd.s32 %s51, 1
      %s53 = scalar_select %p50, %s51, %s52
      %p56 = pneg %p50
      %p57 = scmp.eq.s32.totalorder %s15, 1
      %p58 = por %p56, %p57
      %p59 = scmp.ne.s32.totalorder %s51, %s54
      %p60 = scmp.eq.s32.totalorder %s15, 0
      %p61 = por %p59, %p60
      %p62 = scmp.ne.s32.totalorder %s51, %s54
      %p63 = scmp.eq.s32.totalorder %s20, 1
      %p64 = por %p62, %p63
      %p65 = scmp.ne.s32.totalorder %s54, %s55
      %p66 = scmp.eq.s32.totalorder %s20, 0
      %p67 = por %p65, %p66
      %p68 = scmp.ne.s32.totalorder %s54, %s55
      %p69 = scmp.eq.s32.totalorder %s21, 1
      %p70 = por %p68, %p69
      %p72 = scmp.ne.s32.totalorder %s55, %s71
      %p73 = scmp.eq.s32.totalorder %s21, 0
      %p74 = por %p72, %p73
      %s75 = ssub.s32 %s15, %s22
      %p76 = scmp.eq.s32.totalorder %s75, 0
      %s78 = sadd.s32 %s77, 1
      %s79 = scalar_select %p76, %s77, %s78
      %p82 = pneg %p76
      %p83 = scmp.eq.s32.totalorder %s15, 1
      %p84 = por %p82, %p83
      %p85 = scmp.ne.s32.totalorder %s77, %s80
      %p86 = scmp.eq.s32.totalorder %s15, 0
      %p87 = por %p85, %p86
      %p88 = scmp.ne.s32.totalorder %s77, %s80
      %p89 = scmp.eq.s32.totalorder %s20, 1
      %p90 = por %p88, %p89
      %p91 = scmp.ne.s32.totalorder %s80, %s81
      %p92 = scmp.eq.s32.totalorder %s20, 0
      %p93 = por %p91, %p92
      %p94 = scmp.ne.s32.totalorder %s80, %s81
      %p95 = scmp.eq.s32.totalorder %s21, 1
      %p96 = por %p94, %p95
      %p98 = scmp.ne.s32.totalorder %s81, %s97
      %p99 = scmp.eq.s32.totalorder %s21, 0
      %p100 = por %p98, %p99
      %s102 = sadd.s32 %s101, 1
      %p105 = scmp.eq.s32.totalorder %s15, 1
      %p106 = scmp.ne.s32.totalorder %s101, %s103
      %p107 = scmp.eq.s32.totalorder %s15, 0
      %p108 = por %p106, %p107
      %p109 = scmp.ne.s32.totalorder %s101, %s103
      %p110 = scmp.eq.s32.totalorder %s20, 1
      %p111 = por %p109, %p110
      %p112 = scmp.ne.s32.totalorder %s103, %s104
      %p113 = scmp.eq.s32.totalorder %s20, 0
      %p114 = por %p112, %p113
      %p115 = scmp.ne.s32.totalorder %s103, %s104
      %p116 = scmp.eq.s32.totalorder %s21, 1
      %p117 = por %p115, %p116
      %p119 = scmp.ne.s32.totalorder %s104, %s118
      %p120 = scmp.eq.s32.totalorder %s21, 0
      %p121 = por %p119, %p120
      %s123 = sadd.s32 %s122, 1
      %p126 = scmp.eq.s32.totalorder %s15, 1
      %p127 = scmp.ne.s32.totalorder %s122, %s124
      %p128 = scmp.eq.s32.totalorder %s15, 0
      %p129 = por %p127, %p128
      %p130 = scmp.ne.s32.totalorder %s122, %s124
      %p131 = scmp.eq.s32.totalorder %s20, 1
      %p132 = por %p130, %p131
      %p133 = scmp.ne.s32.totalorder %s124, %s125
      %p134 = scmp.eq.s32.totalorder %s20, 0
      %p135 = por %p133, %p134
      %p136 = scmp.ne.s32.totalorder %s124, %s125
      %p137 = scmp.eq.s32.totalorder %s21, 1
      %p138 = por %p136, %p137
      %p140 = scmp.ne.s32.totalorder %s125, %s139
      %p141 = scmp.eq.s32.totalorder %s21, 0
      %p142 = por %p140, %p141
      %s143 = ssub.s32 %s15, %s22
      %p144 = scmp.eq.s32.totalorder %s143, 0
      %s146 = sadd.s32 %s145, 1
      %s147 = scalar_select %p144, %s145, %s146
      %p150 = pneg %p144
      %p151 = scmp.eq.s32.totalorder %s15, 1
      %p152 = por %p150, %p151
      %p153 = scmp.ne.s32.totalorder %s145, %s148
      %p154 = scmp.eq.s32.totalorder %s15, 0
      %p155 = por %p153, %p154
      %p156 = scmp.ne.s32.totalorder %s145, %s148
      %p157 = scmp.eq.s32.totalorder %s20, 1
      %p158 = por %p156, %p157
      %p159 = scmp.ne.s32.totalorder %s148, %s149
      %p160 = scmp.eq.s32.totalorder %s20, 0
      %p161 = por %p159, %p160
      %p162 = scmp.ne.s32.totalorder %s148, %s149
      %p163 = scmp.eq.s32.totalorder %s21, 1
      %p164 = por %p162, %p163
      %p166 = scmp.ne.s32.totalorder %s149, %s165
      %p167 = scmp.eq.s32.totalorder %s21, 0
      %p168 = por %p166, %p167
      %p169 = scmp.le.s32.totalorder 1, %s15
      %p170 = scmp.lt.s32.totalorder %s15, 3
      %p171 = pnand %p169, %p170
      %p172 = pneg %p171
      // Predicated region
      $region9: #{tpu_custom_call.1} parent=5 // pred_check
        _
      $region10: #{tpu_custom_call.1} parent=5 // pred_check_branch
        %174 = sbr.rel (%p171) target = $region12
      $region11: #{tpu_custom_call.1} parent=5 // pred_region
        %s175 = ssub.s32 %s15, 1
        // Predicated region
        $region13: #{tpu_custom_call.1} parent=11 // pred_check
          %p176 = pneg %p114
        $region14: #{tpu_custom_call.1} parent=11 // pred_check_branch
          %178 = sbr.rel (%p176) target = $region16
        $region15: #{tpu_custom_call.1} parent=11 // pred_region
          %s180 = ssub.s32 512, 512
          %181 = vsyncadd [#allocation3], %s180
          %s182 = sshll.u32 [#allocation2], 4
          %s183 = int_to_ptr.vmem [resolvable:$true] %s182
          %188 = dma.hbm_to_vmem [thread:$0]  %s3, 512, %s183, [#allocation3], 128, 128, 8
        $region16: #{tpu_custom_call.1} parent=11 // pred_fallthru
          _
        // Predicated region
        $region17: #{tpu_custom_call.1} parent=11 // pred_check
          %p189 = pneg %p135
        $region18: #{tpu_custom_call.1} parent=11 // pred_check_branch
          %191 = sbr.rel (%p189) target = $region20
        $region19: #{tpu_custom_call.1} parent=11 // pred_region
          _
        $region20: #{tpu_custom_call.1} parent=11 // pred_fallthru
          _
      $region12: #{tpu_custom_call.1} parent=5 // pred_fallthru
        _
      %p192 = scmp.lt.s32.totalorder %s15, 2
      // Predicated region
      $region21: #{tpu_custom_call.1} parent=5 // pred_check
        %p193 = pneg %p192
      $region22: #{tpu_custom_call.1} parent=5 // pred_check_branch
        %195 = sbr.rel (%p193) target = $region24
      $region23: #{tpu_custom_call.1} parent=5 // pred_region
        // Predicated region
        $region25: #{tpu_custom_call.1} parent=23 // pred_check
          %p196 = pneg %p35
        $region26: #{tpu_custom_call.1} parent=23 // pred_check_branch
          %198 = sbr.rel (%p196) target = $region28
        $region27: #{tpu_custom_call.1} parent=23 // pred_region
          %p199 = scmp.lt.s32.totalorder %s15, 1
          %s200 = scalar_select %p199, %s15, 1
          %s201 = smul.addr %s200, 8
          %s202 = scalar_lea.vmem %s0, %s201
        $region28: #{tpu_custom_call.1} parent=23 // pred_fallthru
          _
        // Predicated region
        $region29: #{tpu_custom_call.1} parent=23 // pred_check
          %p203 = pneg %p61
        $region30: #{tpu_custom_call.1} parent=23 // pred_check_branch
          %205 = sbr.rel (%p203) target = $region32
        $region31: #{tpu_custom_call.1} parent=23 // pred_region
          %p206 = scmp.lt.s32.totalorder %s15, 1
          %s207 = scalar_select %p206, %s15, 1
          %s208 = scalar_lea.vmem %s1, %s207
        $region32: #{tpu_custom_call.1} parent=23 // pred_fallthru
          _
        // Predicated region
        $region33: #{tpu_custom_call.1} parent=23 // pred_check
          %p209 = pneg %p87
        $region34: #{tpu_custom_call.1} parent=23 // pred_check_branch
          %211 = sbr.rel (%p209) target = $region36
        $region35: #{tpu_custom_call.1} parent=23 // pred_region
          %p212 = scmp.lt.s32.totalorder %s15, 1
          %s213 = scalar_select %p212, %s15, 1
          %s214 = smul.addr %s213, 8
          %s215 = scalar_lea.vmem %s2, %s214
        $region36: #{tpu_custom_call.1} parent=23 // pred_fallthru
          _
      $region24: #{tpu_custom_call.1} parent=5 // pred_fallthru
        _
      %p216 = scmp.le.s32.totalorder 1, %s15
      %p217 = scmp.lt.s32.totalorder %s15, 3
      %p218 = pnand %p216, %p217
      %p219 = pneg %p218
      // Predicated region
      $region37: #{tpu_custom_call.1} parent=5 // pred_check
        _
      $region38: #{tpu_custom_call.1} parent=5 // pred_check_branch
        %221 = sbr.rel (%p218) target = $region40
      $region39: #{tpu_custom_call.1} parent=5 // pred_region
        %s222 = ssub.s32 %s15, 1
        // Predicated region
        $region41: #{tpu_custom_call.1} parent=39 // pred_check
          %p223 = pneg %p114
        $region42: #{tpu_custom_call.1} parent=39 // pred_check_branch
          %225 = sbr.rel (%p223) target = $region44
        $region43: #{tpu_custom_call.1} parent=39 // pred_region
          %226 = dma.done [#allocation3], 512
        $region44: #{tpu_custom_call.1} parent=39 // pred_fallthru
          _
        %p227 = scmp.lt.s32.totalorder %s20, 1
        %s228 = scalar_select %p227, %s20, 1
        %s229 = smul.addr %s228, 8
        %s230 = scalar_lea.vmem %s0, %s229
        %p231 = pneg %p41
        %p232 = pneg %p38
        %p233 = scmp.lt.s32.totalorder %s20, 1
        %s234 = scalar_select %p233, %s20, 1
        %s235 = scalar_lea.vmem %s1, %s234
        %p236 = pneg %p67
        %p237 = pneg %p64
        %p238 = scmp.lt.s32.totalorder %s20, 1
        %s239 = scalar_select %p238, %s20, 1
        %s240 = smul.addr %s239, 8
        %s241 = scalar_lea.vmem %s2, %s240
        %p242 = pneg %p93
        %p243 = pneg %p90
        %p244 = pneg %p114
        %p245 = pneg %p111
        %p246 = pneg %p135
        %p247 = pneg %p132
        %p248 = pneg %p161
        %p249 = pneg %p158
        %s250 = sand.u32 %s148, 1
        %s251 = scalar_lea.sflag [#allocation4], %s250
        %s252 = sand.u32 %s148, 1
        %s253 = smul.addr %s252, 8
        %s254 = scalar_lea.vmem [#allocation5], %s253
        %p255 = scmp.lt.s32.totalorder %s20, 1
        %s256 = scalar_select %p255, %s20, 1
        %s257 = smul.addr %s256, 8
        %s258 = scalar_lea.vmem %s0, %s257
        %p259 = scmp.lt.s32.totalorder %s20, 1
        %s260 = scalar_select %p259, %s20, 1
        %s261 = scalar_lea.vmem %s1, %s260
        %p262 = scmp.lt.s32.totalorder %s20, 1
        %s263 = scalar_select %p262, %s20, 1
        %s264 = smul.addr %s263, 8
        %s265 = scalar_lea.vmem %s2, %s264
        %v266 = vld [vmem:[%s258] sm:$0xff]
        %v267 = vld [vmem:[#allocation2] sm:$0xff]
        %v268 = vld [vmem:[#allocation2 + $0x8] sm:$0xff]
        %v269 = vld [vmem:[#allocation2 + $0x10] sm:$0xff]
        %v270 = vld [vmem:[#allocation2 + $0x18] sm:$0xff]
        %vm271 = vcmask 261120
        %v273 = vsel %vm271, %v266, 0
        %275 = vmatprep.subr.mxu0 0.0
        %276 = vmatpush1.msra.mxu0 %v267
        %277 = vmatprep.subr.mxu0 0.0
        %278 = vmatpush1.msra.mxu0 %v268
        %279 = vmatprep.subr.mxu0 0.0
        %280 = vmatpush1.msra.mxu0 %v269
        %281 = vmatprep.subr.mxu0 0.0
        %282 = vmatpush1.msra.mxu0 %v270
        %283 = vmatprep.subr.mxu0 0.0
        %284 = vmatpush1.msra.mxu0 0.0
        %285 = vmatprep.subr.mxu0 0.0
        %286 = vmatpush1.msra.mxu0 0.0
        %287 = vmatprep.subr.mxu0 0.0
        %288 = vmatpush1.msra.mxu0 0.0
        %289 = vmatprep.subr.mxu0 0.0
        %290 = vmatpush1.msra.mxu0 0.0
        %291 = vmatprep.subr.mxu0 0.0
        %292 = vmatpush1.msra.mxu0 0.0
        %293 = vmatprep.subr.mxu0 0.0
        %294 = vmatpush1.msra.mxu0 0.0
        %295 = vmatprep.subr.mxu0 0.0
        %296 = vmatpush1.msra.mxu0 0.0
        %297 = vmatprep.subr.mxu0 0.0
        %298 = vmatpush1.msra.mxu0 0.0
        %299 = vmatprep.subr.mxu0 0.0
        %300 = vmatpush1.msra.mxu0 0.0
        %301 = vmatprep.subr.mxu0 0.0
        %302 = vmatpush1.msra.mxu0 0.0
        %303 = vmatprep.subr.mxu0 0.0
        %304 = vmatpush1.msra.mxu0 0.0
        %305 = vmatprep.subr.mxu0 0.0
        %306 = vmatpush1.msra.mxu0 0.0
        %307 = vmatprep.subr.mxu0 0.0
        %308 = vmatpush1.msra.mxu0 0.0
        %309 = vmatprep.subr.mxu0 0.0
        %310 = vmatpush1.msra.mxu0 0.0
        %311 = vmatprep.subr.mxu0 0.0
        %312 = vmatpush1.msra.mxu0 0.0
        %313 = vmatprep.subr.mxu0 0.0
        %314 = vmatpush1.msra.mxu0 0.0
        %315 = vmatprep.subr.mxu0 0.0
        %316 = vmatpush1.msra.mxu0 0.0
        %317 = vmatprep.subr.mxu0 0.0
        %318 = vmatpush1.msra.mxu0 0.0
        %319 = vmatprep.subr.mxu0 0.0
        %320 = vmatpush1.msra.mxu0 0.0
        %321 = vmatprep.subr.mxu0 0.0
        %322 = vmatpush1.msra.mxu0 0.0
        %323 = vmatprep.subr.mxu0 0.0
        %324 = vmatpush1.msra.mxu0 0.0
        %325 = vmatprep.subr.mxu0 0.0
        %326 = vmatpush1.msra.mxu0 0.0
        %327 = vmatprep.subr.mxu0 0.0
        %328 = vmatpush1.msra.mxu0 0.0
        %329 = vmatprep.subr.mxu0 0.0
        %330 = vmatpush1.msra.mxu0 0.0
        %331 = vmatprep.subr.mxu0 0.0
        %332 = vmatpush1.msra.mxu0 0.0
        %333 = vmatprep.subr.mxu0 0.0
        %334 = vmatpush1.msra.mxu0 0.0
        %335 = vmatprep.subr.mxu0 0.0
        %336 = vmatpush1.msra.mxu0 0.0
        %337 = vmatprep.subr.mxu0 0.0
        %338 = vmatpush1.msra.mxu0 0.0
        %339 = vmatprep.mubr.f32.mxu0 0.0
        %340 = vmatmul.mubr.f32.gmra.mrb[0].mxu0 %v273
        %v341 = vpop.f32.mrb[0].mxu0
        %v342 = vadd.f32 0.0, %v341
        %v343 = vpop.f32.mrb[0].mxu0
        %344 = vdwg.mxu0
        %v345 = vld [vmem:[%s261] sm:$0x1]
        %350 = vrot.lane.b32.xlu0 %v267, 64
        %v351 = vpop.permute.xlu0 %350
        %352 = vrot.lane.b32.xlu0 %v268, 64
        %v353 = vpop.permute.xlu0 %352
        %354 = vrot.lane.b32.xlu0 %v269, 64
        %v355 = vpop.permute.xlu0 %354
        %356 = vrot.lane.b32.xlu0 %v270, 64
        %v357 = vpop.permute.xlu0 %356
        %v363 = vsel %vm271, %v345, 0
        %365 = vmatprep.subr.mxu0 0.0
        %366 = vmatpush1.msra.mxu0 %v351
        %367 = vmatprep.subr.mxu0 0.0
        %368 = vmatpush1.msra.mxu0 %v353
        %369 = vmatprep.subr.mxu0 0.0
        %370 = vmatpush1.msra.mxu0 %v355
        %371 = vmatprep.subr.mxu0 0.0
        %372 = vmatpush1.msra.mxu0 %v357
        %373 = vmatprep.subr.mxu0 0.0
        %374 = vmatpush1.msra.mxu0 0.0
        %375 = vmatprep.subr.mxu0 0.0
        %376 = vmatpush1.msra.mxu0 0.0
        %377 = vmatprep.subr.mxu0 0.0
        %378 = vmatpush1.msra.mxu0 0.0
        %379 = vmatprep.subr.mxu0 0.0
        %380 = vmatpush1.msra.mxu0 0.0
        %381 = vmatprep.subr.mxu0 0.0
        %382 = vmatpush1.msra.mxu0 0.0
        %383 = vmatprep.subr.mxu0 0.0
        %384 = vmatpush1.msra.mxu0 0.0
        %385 = vmatprep.subr.mxu0 0.0
        %386 = vmatpush1.msra.mxu0 0.0
        %387 = vmatprep.subr.mxu0 0.0
        %388 = vmatpush1.msra.mxu0 0.0
        %389 = vmatprep.subr.mxu0 0.0
        %390 = vmatpush1.msra.mxu0 0.0
        %391 = vmatprep.subr.mxu0 0.0
        %392 = vmatpush1.msra.mxu0 0.0
        %393 = vmatprep.subr.mxu0 0.0
        %394 = vmatpush1.msra.mxu0 0.0
        %395 = vmatprep.subr.mxu0 0.0
        %396 = vmatpush1.msra.mxu0 0.0
        %397 = vmatprep.subr.mxu0 0.0
        %398 = vmatpush1.msra.mxu0 0.0
        %399 = vmatprep.subr.mxu0 0.0
        %400 = vmatpush1.msra.mxu0 0.0
        %401 = vmatprep.subr.mxu0 0.0
        %402 = vmatpush1.msra.mxu0 0.0
        %403 = vmatprep.subr.mxu0 0.0
        %404 = vmatpush1.msra.mxu0 0.0
        %405 = vmatprep.subr.mxu0 0.0
        %406 = vmatpush1.msra.mxu0 0.0
        %407 = vmatprep.subr.mxu0 0.0
        %408 = vmatpush1.msra.mxu0 0.0
        %409 = vmatprep.subr.mxu0 0.0
        %410 = vmatpush1.msra.mxu0 0.0
        %411 = vmatprep.subr.mxu0 0.0
        %412 = vmatpush1.msra.mxu0 0.0
        %413 = vmatprep.subr.mxu0 0.0
        %414 = vmatpush1.msra.mxu0 0.0
        %415 = vmatprep.subr.mxu0 0.0
        %416 = vmatpush1.msra.mxu0 0.0
        %417 = vmatprep.subr.mxu0 0.0
        %418 = vmatpush1.msra.mxu0 0.0
        %419 = vmatprep.subr.mxu0 0.0
        %420 = vmatpush1.msra.mxu0 0.0
        %421 = vmatprep.subr.mxu0 0.0
        %422 = vmatpush1.msra.mxu0 0.0
        %423 = vmatprep.subr.mxu0 0.0
        %424 = vmatpush1.msra.mxu0 0.0
        %425 = vmatprep.subr.mxu0 0.0
        %426 = vmatpush1.msra.mxu0 0.0
        %427 = vmatprep.subr.mxu0 0.0
        %428 = vmatpush1.msra.mxu0 0.0
        %429 = vmatprep.mubr.f32.mxu0 0.0
        %430 = vmatmul.mubr.f32.gmra.mrb[0].mxu0 %v363
        %v431 = vpop.f32.mrb[0].mxu0
        %v432 = vadd.f32 0.0, %v431
        %v433 = vpop.f32.mrb[0].mxu0
        %434 = vdwg.mxu0
        %v436 = vrot.slane %v342, 1
        %v439 = vrot.slane %v432, 1
        %440 = vrot.lane.b32.xlu0 %v439, 64
        %v441 = vpop.permute.xlu0 %440
        %vm443 = vcmask 1046528
        %v444 = vsel %vm443, %v436, %v441
        %v445 = vld [vmem:[%s4] sm:$0x1]
        %v447 = vlaneseq
        %v448 = vshrl.u32 %v447, 7
        %v449 = vsub.s32 0, %v448
        %v450 = vrot.slane %v445, %v449
        %v452 = vadd.f32 %v342, %v450
        %v453 = vld [vmem:[%s265] sm:$0xff]
        %455 = vset.pattern.permute.xlu0 0
        %456 = vperm.xlu0 %455, %v453
        %v457 = vpop.permute.xlu0 %456
        %v459 = vmul.f32 %v444, %v457
        %461 = vrot.lane.b32.xlu0 %v459, 96
        %v462 = vpop.permute.xlu0 %461
        %v464 = vadd.f32 %v342, %v462
        %465 = vrot.lane.b32.xlu0 %v450, 32
        %v466 = vpop.permute.xlu0 %465
        %v468 = vadd.f32 %v464, %v466
        %v469 = vsel %vm271, %v452, %v468
        %vm470 = vcmask 523264
        %471 = vst.msk [vmem:[%s254] sm:$0xff] %vm470, %v469
        %s472 = sand.u32 %s148, 1
        %s473 = scalar_lea.sflag [#allocation4], %s472
        %s474 = sand.u32 %s148, 1
        %s475 = smul.addr %s474, 8
        %s476 = scalar_lea.vmem [#allocation5], %s475
        // Predicated region
        $region45: #{tpu_custom_call.1} parent=39 // pred_check
          %p477 = pneg %p158
        $region46: #{tpu_custom_call.1} parent=39 // pred_check_branch
          %479 = sbr.rel (%p477) target = $region48
        $region47: #{tpu_custom_call.1} parent=39 // pred_region
          %s481 = ssub.s32 128, 128
          %482 = vsyncadd %s473, %s481
          %s483 = smul.addr %s20, 128
          %s484 = scalar_lea.hbm %s5, %s483
          %s486 = sshll.u32 %s476, 4
          %s487 = int_to_ptr.vmem [resolvable:$true] %s486
          %489 = dma.vmem_to_hbm [thread:$0]  %s487, 128, %s484, %s473
        $region48: #{tpu_custom_call.1} parent=39 // pred_fallthru
          _
      $region40: #{tpu_custom_call.1} parent=5 // pred_fallthru
        _
      %p490 = scmp.le.s32.totalorder 2, %s15
      // Predicated region
      $region49: #{tpu_custom_call.1} parent=5 // pred_check
        %p491 = pneg %p490
      $region50: #{tpu_custom_call.1} parent=5 // pred_check_branch
        %493 = sbr.rel (%p491) target = $region52
      $region51: #{tpu_custom_call.1} parent=5 // pred_region
        %s494 = ssub.s32 %s15, 2
        // Predicated region
        $region53: #{tpu_custom_call.1} parent=51 // pred_check
          %p495 = pneg %p164
        $region54: #{tpu_custom_call.1} parent=51 // pred_check_branch
          %497 = sbr.rel (%p495) target = $region56
        $region55: #{tpu_custom_call.1} parent=51 // pred_region
          %s498 = sand.u32 %s149, 1
          %s499 = scalar_lea.sflag [#allocation4], %s498
          %s500 = sand.u32 %s149, 1
          %s501 = smul.addr %s500, 8
          %s502 = scalar_lea.vmem [#allocation5], %s501
          %503 = dma.done %s499, 128
        $region56: #{tpu_custom_call.1} parent=51 // pred_fallthru
          _
      $region52: #{tpu_custom_call.1} parent=5 // pred_fallthru
        _
    $region6: #{tpu_custom_call.1} parent=1 // loop_footer
      %s19 = sadd.s32 1, %s15
    $region7: #{tpu_custom_call.1} parent=1 // loop_footer_branch
      %14 = sbr.rel target = $region3
    $region8: #{tpu_custom_call.1} parent=1 // loop_exit
      _
    %504 = vsyncpa [#allocation3], 1
    %s505 = scalar_lea.sflag [#allocation3], 1
    %506 = vsyncpa %s505, 1
    %507 = vsyncpa [#allocation4], 1
    %s508 = scalar_lea.sflag [#allocation4], 1
    %509 = vsyncpa %s508, 1

</llo_original>
